<compile_context>
chip_gen: v5e
topology: v5e:2x2
jax: 0.10.0
libtpu: 0.0.40
codegen_flags: <defaults>
</compile_context>

<pallas_src>
import functools

import jax
import jax.numpy as jnp
from jax.experimental import pallas as pl
from jax.experimental.pallas import tpu as pltpu


def _ce_kernel(logits_ref, target_ref, out_ref, acc_ref, *, hw):
    """Per-(batch, hw-tile) step: per-pixel NLL accumulated into a VMEM scratch."""
    j = pl.program_id(1)

    @pl.when(j == 0)
    def _():
        acc_ref[...] = jnp.zeros_like(acc_ref)

    x = logits_ref[0].astype(jnp.float32)      # (C, tile_hw)  classes on sublanes
    t = target_ref[0]                          # (1, tile_hw)  int32, lane-dense

    # Numerically stable log-sum-exp over the class (sublane) axis.
    m = jnp.max(x, axis=0, keepdims=True)                                   # (1, tile_hw)
    lse = jnp.log(jnp.sum(jnp.exp(x - m), axis=0, keepdims=True)) + m       # (1, tile_hw)

    # Gather the target-class logit via a one-hot select against a sublane iota.
    row = jax.lax.broadcasted_iota(jnp.int32, x.shape, 0)                   # (C, tile_hw)
    tgt_logit = jnp.sum(jnp.where(row == t, x, 0.0), axis=0, keepdims=True)  # (1, tile_hw)

    # Mask the ragged tail of the HW axis (last block may overrun hw).
    tile_hw = x.shape[1]
    col = jax.lax.broadcasted_iota(jnp.int32, (1, tile_hw), 1) + j * tile_hw
    per_pix = jnp.where(col < hw, lse - tgt_logit, 0.0)                     # (1, tile_hw)

    # Vector accumulation (no per-step scalar cross-lane reduce).
    acc_ref[...] += per_pix

    # Emit the per-batch partial sum once, on the final hw step.
    @pl.when(j == pl.num_programs(1) - 1)
    def _():
        out_ref[...] = jnp.full(out_ref.shape, jnp.sum(acc_ref[...]), dtype=jnp.float32)


@jax.jit
def cross_entropy_loss(logit, target):
    """logit: (N, C, H, W) float, target: (N, H, W) int -> scalar float32 loss."""
    n, c, h, w = logit.shape
    hw = h * w

    # NCHW-native views (both reshapes are contiguous -> no HBM copies).
    logits3 = logit.reshape(n, c, hw)
    tgt3 = target.astype(jnp.int32).reshape(n, 1, hw)

    # Tile the HW (lane) axis so one logits block is ~2 MiB: big enough to hide
    # per-step pipeline overhead, small enough (double-buffered ~4 MiB) to fit
    # comfortably under every generation's scoped-VMEM default (v5e 16 MiB,
    # v6e/v7x 32 MiB).
    itemsize = jnp.dtype(logit.dtype).itemsize
    tile_hw = (2 * 1024 * 1024) // (c * itemsize)
    tile_hw = max(128, (tile_hw // 128) * 128)
    if tile_hw >= hw:
        tile_hw = hw  # single block covers the full HW axis (any size allowed)
    num_hw = pl.cdiv(hw, tile_hw)

    kernel = functools.partial(_ce_kernel, hw=hw)

    # TODO(synk): PyTorch's ignore_index=-100 semantics (drop ignored targets
    # from both numerator and denominator) are not implemented; all targets are
    # assumed to be valid class indices, as in this module's usage.
    partial_sums = pl.pallas_call(
        kernel,
        out_shape=jax.ShapeDtypeStruct((n, 1, 128), jnp.float32),
        grid_spec=pltpu.PrefetchScalarGridSpec(
            num_scalar_prefetch=0,
            grid=(n, num_hw),
            in_specs=[
                pl.BlockSpec((1, c, tile_hw), lambda b, j: (b, 0, j)),
                pl.BlockSpec((1, 1, tile_hw), lambda b, j: (b, 0, j)),
            ],
            out_specs=pl.BlockSpec((1, 1, 128), lambda b, j: (b, 0, 0)),
            scratch_shapes=[pltpu.VMEM((1, tile_hw), jnp.float32)],
        ),
        compiler_params=pltpu.CompilerParams(
            dimension_semantics=("parallel", "arbitrary"),
        ),
    )(logits3, tgt3)

    # reduction='mean' over all N*H*W elements, then the module divides by n.
    loss_sum = jnp.sum(partial_sums[:, 0, 0])
    loss = loss_sum / jnp.float32(n * hw)
    loss = loss / jnp.float32(n)
    return loss


def _reference(logit, target):
    n, c, h, w = logit.shape
    rows = jnp.transpose(logit, (0, 2, 3, 1)).reshape(-1, c).astype(jnp.float32)
    t = target.reshape(-1).astype(jnp.int32)
    logp = jax.nn.log_softmax(rows, axis=-1)
    nll = -jnp.take_along_axis(logp, t[:, None], axis=-1)[:, 0]
    return jnp.mean(nll) / n


if __name__ == "__main__":
    key = jax.random.PRNGKey(0)
    k1, k2 = jax.random.split(key)

    N, C, H, W = 2, 4, 16, 16
    logit = jax.random.normal(k1, (N, C, H, W), dtype=jnp.float32)
    target = jax.random.randint(k2, (N, H, W), 0, C, dtype=jnp.int32)

    out = cross_entropy_loss(logit, target)
    out = jax.block_until_ready(out)

    ref = _reference(logit, target)
    assert jnp.allclose(out, ref, atol=1e-5, rtol=1e-5), (out, ref)

    print("KERNEL_OK")
</pallas_src>

<mosaic_0001>
module attributes {stable_mosaic.version = 11 : i64} {
  func.func @_ce_kernel(%arg0: i32, %arg1: i32, %arg2: memref<1x4x256xf32, #tpu.memory_space<vmem>>, %arg3: memref<1x1x256xi32, #tpu.memory_space<vmem>>, %arg4: memref<1x1x128xf32, #tpu.memory_space<vmem>>, %arg5: memref<1x256xf32, #tpu.memory_space<vmem>>) attributes {dimension_semantics = [#tpu.dimension_semantics<parallel>, #tpu.dimension_semantics<arbitrary>], iteration_bounds = array<i64: 2, 1>, scalar_prefetch = 0 : i64, scratch_operands = 1 : i64, tpu.core_type = #tpu.core_type<tc>, window_params = [{transform_indices = @transform_0, window_bounds = array<i64: 1, 4, 256>}, {transform_indices = @transform_1, window_bounds = array<i64: 1, 1, 256>}, {transform_indices = @transform_2, window_bounds = array<i64: 1, 1, 128>}]} {
    %c0_i32 = arith.constant 0 : i32
    %0 = arith.cmpi eq, %arg1, %c0_i32 : i32
    %1 = arith.extui %0 : i1 to i32
    %c0_i32_0 = arith.constant 0 : i32
    %2 = arith.cmpi ne, %1, %c0_i32_0 : i32
    scf.if %2 {
      %cst_17 = arith.constant 0.000000e+00 : f32
      %38 = vector.broadcast %cst_17 : f32 to vector<1x256xf32>
      %c0_18 = arith.constant 0 : index
      %c0_19 = arith.constant 0 : index
      %39 = vector.load %arg5[%c0_18, %c0_19] : memref<1x256xf32, #tpu.memory_space<vmem>>, vector<1x256xf32>
      tpu.vector_store %arg5[%c0_18, %c0_19], %38 {strides = array<i32>} : memref<1x256xf32, #tpu.memory_space<vmem>>, vector<1x256xf32>,
    } else {
    }
    %c0 = arith.constant 0 : index
    %c0_1 = arith.constant 0 : index
    %c0_2 = arith.constant 0 : index
    %3 = vector.load %arg2[%c0, %c0_1, %c0_2] : memref<1x4x256xf32, #tpu.memory_space<vmem>>, vector<1x4x256xf32>
    %4 = vector.shape_cast %3 : vector<1x4x256xf32> to vector<4x256xf32>
    %c0_3 = arith.constant 0 : index
    %c0_4 = arith.constant 0 : index
    %c0_5 = arith.constant 0 : index
    %5 = vector.load %arg3[%c0_3, %c0_4, %c0_5] : memref<1x1x256xi32, #tpu.memory_space<vmem>>, vector<1x1x256xi32>
    %6 = vector.shape_cast %5 : vector<1x1x256xi32> to vector<1x256xi32>
    %cst = arith.constant dense<0xFF800000> : vector<256xf32>
    %7 = vector.multi_reduction <maximumf>, %4, %cst [0] : vector<4x256xf32> to vector<256xf32>
    %8 = vector.shape_cast %7 : vector<256xf32> to vector<1x256xf32>
    %9 = vector.broadcast %8 : vector<1x256xf32> to vector<4x256xf32>
    %10 = arith.subf %4, %9 : vector<4x256xf32>
    %11 = math.exp %10 : vector<4x256xf32>
    %cst_6 = arith.constant dense<0.000000e+00> : vector<256xf32>
    %12 = vector.multi_reduction <add>, %11, %cst_6 [0] : vector<4x256xf32> to vector<256xf32>
    %13 = vector.shape_cast %12 : vector<256xf32> to vector<1x256xf32>
    %14 = math.log %13 : vector<1x256xf32>
    %15 = arith.addf %14, %8 : vector<1x256xf32>
    %16 = tpu.iota {dimensions = array<i32: 0>} : vector<4x256xi32>
    %17 = vector.broadcast %6 : vector<1x256xi32> to vector<4x256xi32>
    %18 = arith.cmpi eq, %16, %17 : vector<4x256xi32>
    %cst_7 = arith.constant 0.000000e+00 : f32
    %19 = vector.broadcast %cst_7 : f32 to vector<4x256xf32>
    %20 = arith.select %18, %4, %19 : vector<4x256xi1>, vector<4x256xf32>
    %cst_8 = arith.constant dense<0.000000e+00> : vector<256xf32>
    %21 = vector.multi_reduction <add>, %20, %cst_8 [0] : vector<4x256xf32> to vector<256xf32>
    %22 = vector.shape_cast %21 : vector<256xf32> to vector<1x256xf32>
    %23 = tpu.iota {dimensions = array<i32: 1>} : vector<1x256xi32>
    %c256_i32 = arith.constant 256 : i32
    %24 = arith.muli %arg1, %c256_i32 : i32
    %25 = vector.broadcast %24 : i32 to vector<1x256xi32>
    %26 = arith.addi %23, %25 : vector<1x256xi32>
    %c256_i32_9 = arith.constant 256 : i32
    %27 = vector.broadcast %c256_i32_9 : i32 to vector<1x256xi32>
    %28 = arith.cmpi slt, %26, %27 : vector<1x256xi32>
    %29 = arith.subf %15, %22 : vector<1x256xf32>
    %cst_10 = arith.constant 0.000000e+00 : f32
    %30 = vector.broadcast %cst_10 : f32 to vector<1x256xf32>
    %31 = arith.select %28, %29, %30 : vector<1x256xi1>, vector<1x256xf32>
    %c0_11 = arith.constant 0 : index
    %c0_12 = arith.constant 0 : index
    %32 = vector.load %arg5[%c0_11, %c0_12] : memref<1x256xf32, #tpu.memory_space<vmem>>, vector<1x256xf32>
    %33 = arith.addf %32, %31 : vector<1x256xf32>
    %c0_13 = arith.constant 0 : index
    %c0_14 = arith.constant 0 : index
    %34 = vector.load %arg5[%c0_13, %c0_14] : memref<1x256xf32, #tpu.memory_space<vmem>>, vector<1x256xf32>
    tpu.vector_store %arg5[%c0_13, %c0_14], %33 {strides = array<i32>} : memref<1x256xf32, #tpu.memory_space<vmem>>, vector<1x256xf32>,
    %c0_i32_15 = arith.constant 0 : i32
    %35 = arith.cmpi eq, %arg1, %c0_i32_15 : i32
    %36 = arith.extui %35 : i1 to i32
    %c0_i32_16 = arith.constant 0 : i32
    %37 = arith.cmpi ne, %36, %c0_i32_16 : i32
    scf.if %37 {
      %c0_17 = arith.constant 0 : index
      %c0_18 = arith.constant 0 : index
      %38 = vector.load %arg5[%c0_17, %c0_18] : memref<1x256xf32, #tpu.memory_space<vmem>>, vector<1x256xf32>
      %39 = vector.shape_cast %38 : vector<1x256xf32> to vector<1x1x256xf32>
      %cst_19 = arith.constant dense<0.000000e+00> : vector<1xf32>
      %40 = vector.multi_reduction <add>, %39, %cst_19 [1, 2] : vector<1x1x256xf32> to vector<1xf32>
      %41 = vector.shape_cast %40 : vector<1xf32> to vector<1x1x1xf32>
      %42 = vector.extract %41[0, 0, 0] : f32 from vector<1x1x1xf32>
      %43 = vector.broadcast %42 : f32 to vector<1x1x128xf32>
      %c0_20 = arith.constant 0 : index
      %c0_21 = arith.constant 0 : index
      %c0_22 = arith.constant 0 : index
      %44 = vector.load %arg4[%c0_20, %c0_21, %c0_22] : memref<1x1x128xf32, #tpu.memory_space<vmem>>, vector<1x1x128xf32>
      tpu.vector_store %arg4[%c0_20, %c0_21, %c0_22], %43 {strides = array<i32>} : memref<1x1x128xf32, #tpu.memory_space<vmem>>, vector<1x1x128xf32>,
    } else {
    }
    return
  }
  func.func @transform_0(%arg0: i32, %arg1: i32) -> (i32, i32, i32) {
    %c0_i32 = arith.constant 0 : i32
    %c0_i32_0 = arith.constant 0 : i32
    return %arg0, %c0_i32, %arg1 : i32, i32, i32
  }
  func.func @transform_1(%arg0: i32, %arg1: i32) -> (i32, i32, i32) {
    %c0_i32 = arith.constant 0 : i32
    %c0_i32_0 = arith.constant 0 : i32
    return %arg0, %c0_i32, %arg1 : i32, i32, i32
  }
  func.func @transform_2(%arg0: i32, %arg1: i32) -> (i32, i32, i32) {
    %c0_i32 = arith.constant 0 : i32
    %c0_i32_0 = arith.constant 0 : i32
    %c0_i32_1 = arith.constant 0 : i32
    return %arg0, %c0_i32, %c0_i32_0 : i32, i32, i32
  }
}

</mosaic_0001>

<llo_original>
// kernel: cross_entropy_loss.1
$region0: #{cross_entropy_loss.1}
  #allocation0 [shape = 'u32[]', space=smem, size = 0x4, offset = 0x4, fixed_abs, tag = 'smem constant byte address 0x4 - core index']
  #allocation1 [shape = 'u32[72,128]{1,0:T(1,128)}', space=vmem, size = 0x9000, scoped, tag = 'internal scratch']
  #allocation2 [shape = 'f32[1,256]{1,0:T(1,128)}', space=vmem, size = 0x400, scoped, tag = 'scratch operand']
  %s0 = inlined_call_operand.vmem [shape: f32[2,4,256], index: 0, kind: input, shape index: {}]
  %s1 = inlined_call_operand.vmem [shape: s32[2,1,256], index: 1, kind: input, shape index: {}]
  %s2 = inlined_call_operand.vmem [shape: f32[2,1,128], index: 2, kind: output, shape index: {}]
  %s3 = sld [smem:[#allocation0]]
  $region49: #{cross_entropy_loss.1} parent=0
    _
  %s5 = ssub.s32 1, %s3
  %s6 = scalar_select 0, %s5, %s3
  loop: start=0, step=1, limit=4
  $region2: #{cross_entropy_loss.1} parent=0 // loop_pre_header
    _
  $region3: #{cross_entropy_loss.1} parent=0 // loop_header
    %s8 = sphi 0, %s12
    %p9 = scmp.ge.s32.totalorder %s8, 4
    %s15 = sphi 0, %s27
    %s16 = sphi 0, %s23
    %s17 = sphi 0, %s15
    %s18 = sphi 0, %s16
    %s19 = sphi 0, %s17
    %s20 = sphi 0, %s18
    %s32 = sphi 0, %s34
    %s35 = sphi 0, %s32
    %s36 = sphi 0, %s35
    %s52 = sphi 0, %s36
    %s60 = sphi 0, %s62
    %s63 = sphi 0, %s60
    %s64 = sphi 0, %s63
    %s80 = sphi 0, %s64
    %s86 = sphi 0, %s88
    %s89 = sphi 0, %s86
    %s90 = sphi 0, %s89
    %s106 = sphi 0, %s90
  $region4: #{cross_entropy_loss.1} parent=0 // loop_header_branch
    %11 = sbr.rel (%p9) target = $region8
  $region5: #{cross_entropy_loss.1} parent=0 // loop_body
    %s13 = ssub.s32 %s8, 1
    %s14 = ssub.s32 %s8, 2
    %s21 = sadd.s32 1, %s16
    %p22 = scmp.ge.s32.totalorder %s21, 1
    %s23 = scalar_select %p22, 0, %s21
    %s24 = sadd.s32 1, %s15
    %s25 = scalar_select %p22, %s24, %s15
    %p26 = scmp.ge.s32.totalorder %s25, 2
    %s27 = scalar_select %p26, 0, %s25
    %s28 = ssub.s32 %s15, %s27
    %s29 = ssub.s32 %s16, %s23
    %s30 = sor.u32 %s28, %s29
    %p31 = scmp.eq.s32.totalorder %s30, 0
    %s33 = sadd.s32 %s32, 1
    %s34 = scalar_select %p31, %s32, %s33
    %p37 = pneg %p31
    %p38 = scmp.eq.s32.totalorder %s8, 1
    %p39 = por %p37, %p38
    %p40 = scmp.ne.s32.totalorder %s32, %s35
    %p41 = scmp.eq.s32.totalorder %s8, 0
    %p42 = por %p40, %p41
    %p43 = scmp.ne.s32.totalorder %s32, %s35
    %p44 = scmp.eq.s32.totalorder %s13, 1
    %p45 = por %p43, %p44
    %p46 = scmp.ne.s32.totalorder %s35, %s36
    %p47 = scmp.eq.s32.totalorder %s13, 0
    %p48 = por %p46, %p47
    %p49 = scmp.ne.s32.totalorder %s35, %s36
    %p50 = scmp.eq.s32.totalorder %s14, 1
    %p51 = por %p49, %p50
    %p53 = scmp.ne.s32.totalorder %s36, %s52
    %p54 = scmp.eq.s32.totalorder %s14, 0
    %p55 = por %p53, %p54
    %s56 = ssub.s32 %s15, %s27
    %s57 = ssub.s32 %s16, %s23
    %s58 = sor.u32 %s56, %s57
    %p59 = scmp.eq.s32.totalorder %s58, 0
    %s61 = sadd.s32 %s60, 1
    %s62 = scalar_select %p59, %s60, %s61
    %p65 = pneg %p59
    %p66 = scmp.eq.s32.totalorder %s8, 1
    %p67 = por %p65, %p66
    %p68 = scmp.ne.s32.totalorder %s60, %s63
    %p69 = scmp.eq.s32.totalorder %s8, 0
    %p70 = por %p68, %p69
    %p71 = scmp.ne.s32.totalorder %s60, %s63
    %p72 = scmp.eq.s32.totalorder %s13, 1
    %p73 = por %p71, %p72
    %p74 = scmp.ne.s32.totalorder %s63, %s64
    %p75 = scmp.eq.s32.totalorder %s13, 0
    %p76 = por %p74, %p75
    %p77 = scmp.ne.s32.totalorder %s63, %s64
    %p78 = scmp.eq.s32.totalorder %s14, 1
    %p79 = por %p77, %p78
    %p81 = scmp.ne.s32.totalorder %s64, %s80
    %p82 = scmp.eq.s32.totalorder %s14, 0
    %p83 = por %p81, %p82
    %s84 = ssub.s32 %s15, %s27
    %p85 = scmp.eq.s32.totalorder %s84, 0
    %s87 = sadd.s32 %s86, 1
    %s88 = scalar_select %p85, %s86, %s87
    %p91 = pneg %p85
    %p92 = scmp.eq.s32.totalorder %s8, 1
    %p93 = por %p91, %p92
    %p94 = scmp.ne.s32.totalorder %s86, %s89
    %p95 = scmp.eq.s32.totalorder %s8, 0
    %p96 = por %p94, %p95
    %p97 = scmp.ne.s32.totalorder %s86, %s89
    %p98 = scmp.eq.s32.totalorder %s13, 1
    %p99 = por %p97, %p98
    %p100 = scmp.ne.s32.totalorder %s89, %s90
    %p101 = scmp.eq.s32.totalorder %s13, 0
    %p102 = por %p100, %p101
    %p103 = scmp.ne.s32.totalorder %s89, %s90
    %p104 = scmp.eq.s32.totalorder %s14, 1
    %p105 = por %p103, %p104
    %p107 = scmp.ne.s32.totalorder %s90, %s106
    %p108 = scmp.eq.s32.totalorder %s14, 0
    %p109 = por %p107, %p108
    %p110 = scmp.le.s32.totalorder 1, %s8
    %p111 = scmp.lt.s32.totalorder %s8, 3
    %p112 = pnand %p110, %p111
    %p113 = pneg %p112
    // Predicated region
    $region9: #{cross_entropy_loss.1} parent=5 // pred_check
      _
    $region10: #{cross_entropy_loss.1} parent=5 // pred_check_branch
      %115 = sbr.rel (%p112) target = $region12
    $region11: #{cross_entropy_loss.1} parent=5 // pred_region
      %s116 = ssub.s32 %s8, 1
    $region12: #{cross_entropy_loss.1} parent=5 // pred_fallthru
      _
    %p117 = scmp.lt.s32.totalorder %s8, 2
    // Predicated region
    $region13: #{cross_entropy_loss.1} parent=5 // pred_check
      %p118 = pneg %p117
    $region14: #{cross_entropy_loss.1} parent=5 // pred_check_branch
      %120 = sbr.rel (%p118) target = $region16
    $region15: #{cross_entropy_loss.1} parent=5 // pred_region
      // Predicated region
      $region17: #{cross_entropy_loss.1} parent=15 // pred_check
        %p121 = pneg %p42
      $region18: #{cross_entropy_loss.1} parent=15 // pred_check_branch
        %123 = sbr.rel (%p121) target = $region20
      $region19: #{cross_entropy_loss.1} parent=15 // pred_region
        %s124 = smul.u32 2, %s16
        %p125 = scmp.lt.s32.totalorder %s15, 1
        %s126 = scalar_select %p125, %s15, 1
        %p127 = scmp.lt.s32.totalorder %s124, 1
        %s128 = scalar_select %p127, %s124, 1
        %s129 = smul.addr %s126, 2
        %s130 = sadd.s32 %s128, %s129
        %s131 = smul.addr %s130, 4
        %s132 = scalar_lea.vmem %s0, %s131
        %s133 = smul.u32 2, %s16
      $region20: #{cross_entropy_loss.1} parent=15 // pred_fallthru
        _
      // Predicated region
      $region21: #{cross_entropy_loss.1} parent=15 // pred_check
        %p134 = pneg %p70
      $region22: #{cross_entropy_loss.1} parent=15 // pred_check_branch
        %136 = sbr.rel (%p134) target = $region24
      $region23: #{cross_entropy_loss.1} parent=15 // pred_region
        %s137 = smul.u32 2, %s16
        %p138 = scmp.lt.s32.totalorder %s15, 1
        %s139 = scalar_select %p138, %s15, 1
        %p140 = scmp.lt.s32.totalorder %s137, 1
        %s141 = scalar_select %p140, %s137, 1
        %s142 = smul.addr %s139, 2
        %s143 = sadd.s32 %s141, %s142
        %s144 = scalar_lea.vmem %s1, %s143
        %s145 = smul.u32 2, %s16
      $region24: #{cross_entropy_loss.1} parent=15 // pred_fallthru
        _
    $region16: #{cross_entropy_loss.1} parent=5 // pred_fallthru
      _
    %p146 = scmp.le.s32.totalorder 1, %s8
    %p147 = scmp.lt.s32.totalorder %s8, 3
    %p148 = pnand %p146, %p147
    %p149 = pneg %p148
    // Predicated region
    $region25: #{cross_entropy_loss.1} parent=5 // pred_check
      _
    $region26: #{cross_entropy_loss.1} parent=5 // pred_check_branch
      %151 = sbr.rel (%p148) target = $region28
    $region27: #{cross_entropy_loss.1} parent=5 // pred_region
      %s152 = ssub.s32 %s8, 1
      %s153 = smul.u32 2, %s18
      %p154 = scmp.lt.s32.totalorder %s17, 1
      %s155 = scalar_select %p154, %s17, 1
      %p156 = scmp.lt.s32.totalorder %s153, 1
      %s157 = scalar_select %p156, %s153, 1
      %s158 = smul.addr %s155, 2
      %s159 = sadd.s32 %s157, %s158
      %s160 = smul.addr %s159, 4
      %s161 = scalar_lea.vmem %s0, %s160
      %p162 = pneg %p48
      %p163 = pneg %p45
      %s164 = smul.u32 2, %s18
      %p165 = scmp.lt.s32.totalorder %s17, 1
      %s166 = scalar_select %p165, %s17, 1
      %p167 = scmp.lt.s32.totalorder %s164, 1
      %s168 = scalar_select %p167, %s164, 1
      %s169 = smul.addr %s166, 2
      %s170 = sadd.s32 %s168, %s169
      %s171 = scalar_lea.vmem %s1, %s170
      %p172 = pneg %p76
      %p173 = pneg %p73
      %p174 = pneg %p102
      %p175 = pneg %p99
      %p176 = scmp.lt.s32.totalorder %s17, 1
      %s177 = scalar_select %p176, %s17, 1
      %s178 = scalar_lea.vmem %s2, %s177
      %s179 = smul.u32 2, %s18
      %p180 = scmp.lt.s32.totalorder %s17, 1
      %s181 = scalar_select %p180, %s17, 1
      %p182 = scmp.lt.s32.totalorder %s179, 1
      %s183 = scalar_select %p182, %s179, 1
      %s184 = smul.addr %s181, 2
      %s185 = sadd.s32 %s183, %s184
      %s186 = smul.addr %s185, 4
      %s187 = scalar_lea.vmem %s0, %s186
      %s188 = smul.u32 2, %s18
      %s189 = smul.u32 2, %s18
      %p190 = scmp.lt.s32.totalorder %s17, 1
      %s191 = scalar_select %p190, %s17, 1
      %p192 = scmp.lt.s32.totalorder %s189, 1
      %s193 = scalar_select %p192, %s189, 1
      %s194 = smul.addr %s191, 2
      %s195 = sadd.s32 %s193, %s194
      %s196 = scalar_lea.vmem %s1, %s195
      %s197 = smul.u32 2, %s18
      %p198 = scmp.lt.s32.totalorder %s17, 1
      %s199 = scalar_select %p198, %s17, 1
      %s200 = scalar_lea.vmem %s2, %s199
      %p201 = scmp.eq.s32.totalorder %s18, 0
      // Predicated region
      $region29: #{cross_entropy_loss.1} parent=27 // pred_check
        %p202 = pneg %p201
      $region30: #{cross_entropy_loss.1} parent=27 // pred_check_branch
        %204 = sbr.rel (%p202) target = $region32
      $region31: #{cross_entropy_loss.1} parent=27 // pred_region
        %v205 = vlaneseq
        %vm206 = vcmp.ge.s32.totalorder %v205, 0
        %vm207 = vcmp.lt.s32.totalorder %v205, 256
        %vm208 = vmand %vm206, %vm207
        %209 = vst.msk [vmem:[#allocation2] sm:$0x3] %vm208, 0.0
      $region32: #{cross_entropy_loss.1} parent=27 // pred_fallthru
        _
      %v210 = vld [vmem:[%s187] sm:$0xff]
      %v211 = vld [vmem:[%s196] sm:$0x3]
      %213 = vst [vmem:[#allocation1] ss:$2 sm:$0xff] %v210
      %v214 = vld.sshfl [vmem:[#allocation1] sm:$0xff pattern:$0x75316420]
      %v215 = vld.sshfl [vmem:[#allocation1 + $0x8] sm:$0xff pattern:$0x75316420]
      %vm218 = vcmask 1043456
      %v219 = vsel %vm218, %v214, -inf
      %v220 = vrot.slane %v219, 4
      %v221 = vmax.f32 %v219, %v220
      %v222 = vrot.slane %v221, 2
      %v223 = vmax.f32 %v221, %v222
      %v224 = vrot.slane %v223, 1
      %v225 = vmax.f32 %v223, %v224
      %v226 = vsel %vm218, %v215, -inf
      %v227 = vrot.slane %v226, 4
      %v228 = vmax.f32 %v226, %v227
      %v229 = vrot.slane %v228, 2
      %v230 = vmax.f32 %v228, %v229
      %v231 = vrot.slane %v230, 1
      %v232 = vmax.f32 %v230, %v231
      %v235 = vrot.slane %v232, 4
      %v236 = vsel %vm218, %v225, %v235
      %v238 = vsub.f32 %v210, %v236
      %v239 = vmul.f32 %v238, 1.442695
      %v240 = vpow.pop %v239
      %242 = vst [vmem:[#allocation1] ss:$2 sm:$0xff] %v240
      %v243 = vld.sshfl [vmem:[#allocation1] sm:$0xff pattern:$0x75316420]
      %v244 = vld.sshfl [vmem:[#allocation1 + $0x8] sm:$0xff pattern:$0x75316420]
      %v247 = vsel %vm218, %v243, 0.0
      %v248 = vrot.slane %v247, 4
      %v249 = vadd.f32 %v247, %v248
      %v250 = vrot.slane %v249, 2
      %v251 = vadd.f32 %v249, %v250
      %v252 = vrot.slane %v251, 1
      %v253 = vadd.f32 %v251, %v252
      %v254 = vsel %vm218, %v244, 0.0
      %v255 = vrot.slane %v254, 4
      %v256 = vadd.f32 %v254, %v255
      %v257 = vrot.slane %v256, 2
      %v258 = vadd.f32 %v256, %v257
      %v259 = vrot.slane %v258, 1
      %v260 = vadd.f32 %v258, %v259
      %v261 = vlog2.pop %v253
      %v262 = vmul.f32 %v261, 0.6931472
      %v263 = vlog2.pop %v260
      %v264 = vmul.f32 %v263, 0.6931472
      %v265 = vadd.f32 %v262, %v225
      %v266 = vadd.f32 %v264, %v232
      %v267 = vlaneseq
      %v268 = vshrl.u32 %v267, 7
      %v269 = vperm.slane %v211, 0
      %v270 = vperm.slane %v211, 1
      %vm271 = vcmp.eq.s32.totalorder %v268, %v269
      %vm272 = vcmp.eq.s32.totalorder %v268, %v270
      %273 = vst [vmem:[#allocation1] ss:$2 sm:$0xff] %v210
      %v274 = vld.sshfl [vmem:[#allocation1] sm:$0xff pattern:$0x75316420]
      %v275 = vld.sshfl [vmem:[#allocation1 + $0x8] sm:$0xff pattern:$0x75316420]
      %v278 = vsel %vm271, %v274, 0.0
      %v279 = vsel %vm272, %v275, 0.0
      %v280 = vsel %vm218, %v278, 0.0
      %v281 = vrot.slane %v280, 4
      %v282 = vadd.f32 %v280, %v281
      %v283 = vrot.slane %v282, 2
      %v284 = vadd.f32 %v282, %v283
      %v285 = vrot.slane %v284, 1
      %v286 = vadd.f32 %v284, %v285
      %v287 = vsel %vm218, %v279, 0.0
      %v288 = vrot.slane %v287, 4
      %v289 = vadd.f32 %v287, %v288
      %v290 = vrot.slane %v289, 2
      %v291 = vadd.f32 %v289, %v290
      %v292 = vrot.slane %v291, 1
      %v293 = vadd.f32 %v291, %v292
      %v294 = vlaneseq
      %v295 = vand.u32 %v294, 127
      %v296 = vadd.s32 %v295, 128
      %s297 = smul.u32 %s18, 256
      %v298 = vstv %s297
      %v299 = vadd.s32 %v295, %v298
      %v300 = vadd.s32 %v296, %v298
      %vm301 = vcmp.lt.s32.totalorder %v299, 256
      %vm302 = vcmp.lt.s32.totalorder %v300, 256
      %v303 = vsub.f32 %v265, %v286
      %v304 = vsub.f32 %v266, %v293
      %v305 = vsel %vm301, %v303, 0.0
      %v306 = vsel %vm302, %v304, 0.0
      %v307 = vld [vmem:[#allocation2] sm:$0x3]
      %v310 = vrot.slane %v306, 7
      %vm311 = vcmask 1040384
      %v312 = vsel %vm311, %v305, %v310
      %v314 = vadd.f32 %v307, %v312
      %v315 = vlaneseq
      %vm316 = vcmp.ge.s32.totalorder %v315, 0
      %vm317 = vcmp.lt.s32.totalorder %v315, 256
      %vm318 = vmand %vm316, %vm317
      %319 = vst.msk [vmem:[#allocation2] sm:$0x3] %vm318, %v314
      // Predicated region
      $region33: #{cross_entropy_loss.1} parent=27 // pred_check
        %p320 = pneg %p201
      $region34: #{cross_entropy_loss.1} parent=27 // pred_check_branch
        %322 = sbr.rel (%p320) target = $region36
      $region35: #{cross_entropy_loss.1} parent=27 // pred_region
        %v323 = vld [vmem:[#allocation2] sm:$0x3]
        %v325 = vperm.slane %v323, 0
        %v326 = vperm.slane %v323, 1
        %v329 = vsel %vm311, %v325, 0.0
        %v330 = vsel %vm311, %v326, 0.0
        %v331 = vadd.f32 %v329, %v330
        %332 = vadd.xlane.f32.xlu0 %v331
        %v333 = vpop.xlane.xlu0 %332
        %v334 = vrot.slane %v333, 4
        %v335 = vadd.f32 %v333, %v334
        %v336 = vrot.slane %v335, 2
        %v337 = vadd.f32 %v335, %v336
        %v338 = vrot.slane %v337, 1
        %v339 = vadd.f32 %v337, %v338
        %s340 = vtos %v339
        %v341 = vstv %s340
        %342 = vst [vmem:[%s200] sm:$0x1] %v341
      $region36: #{cross_entropy_loss.1} parent=27 // pred_fallthru
        _
      %p343 = scmp.lt.s32.totalorder %s17, 1
      %s344 = scalar_select %p343, %s17, 1
      %s345 = scalar_lea.vmem %s2, %s344
      // Predicated region
      $region37: #{cross_entropy_loss.1} parent=27 // pred_check
        %p346 = pneg %p99
      $region38: #{cross_entropy_loss.1} parent=27 // pred_check_branch
        %348 = sbr.rel (%p346) target = $region40
      $region39: #{cross_entropy_loss.1} parent=27 // pred_region
        _
      $region40: #{cross_entropy_loss.1} parent=27 // pred_fallthru
        _
    $region28: #{cross_entropy_loss.1} parent=5 // pred_fallthru
      _
    %p349 = scmp.le.s32.totalorder 2, %s8
    // Predicated region
    $region41: #{cross_entropy_loss.1} parent=5 // pred_check
      %p350 = pneg %p349
    $region42: #{cross_entropy_loss.1} parent=5 // pred_check_branch
      %352 = sbr.rel (%p350) target = $region44
    $region43: #{cross_entropy_loss.1} parent=5 // pred_region
      %s353 = ssub.s32 %s8, 2
      // Predicated region
      $region45: #{cross_entropy_loss.1} parent=43 // pred_check
        %p354 = pneg %p105
      $region46: #{cross_entropy_loss.1} parent=43 // pred_check_branch
        %356 = sbr.rel (%p354) target = $region48
      $region47: #{cross_entropy_loss.1} parent=43 // pred_region
        %p357 = scmp.lt.s32.totalorder %s19, 1
        %s358 = scalar_select %p357, %s19, 1
        %s359 = scalar_lea.vmem %s2, %s358
      $region48: #{cross_entropy_loss.1} parent=43 // pred_fallthru
        _
    $region44: #{cross_entropy_loss.1} parent=5 // pred_fallthru
      _
  $region6: #{cross_entropy_loss.1} parent=0 // loop_footer
    %s12 = sadd.s32 1, %s8
  $region7: #{cross_entropy_loss.1} parent=0 // loop_footer_branch
    %7 = sbr.rel target = $region3
  $region8: #{cross_entropy_loss.1} parent=0 // loop_exit
    _

</llo_original>
